<compile_context>
chip_gen: v6e
topology: v6e:2x2x1
jax: 0.10.0
libtpu: 0.0.40
codegen_flags: <defaults>
</compile_context>

<pallas_src>
import functools

import jax
import jax.numpy as jnp
from jax.experimental import pallas as pl
from jax.experimental.pallas import tpu as pltpu

_MiB = 1024 * 1024


def _layernorm_kernel(x_ref, alpha_ref, bias_ref, o_ref, *, eps, inv_n, inv_nm1):
    # x_ref: (tile_rows, features); alpha/bias: (1, features).
    # Single sweep: sum(x) and sum(x*x) together, then a fused
    # (x - mean) * inv * alpha + bias, so only one tile-sized f32 temporary
    # (the upcast x) stays live — on v7x the vld/vst slot budget, not HBM,
    # is the binding resource.
    x = x_ref[...].astype(jnp.float32)
    s = jnp.sum(x, axis=-1, keepdims=True)
    ss = jnp.sum(x * x, axis=-1, keepdims=True)
    mean = s * inv_n
    # Unbiased (ddof=1) variance, matching torch.std default:
    #   sum((x - mean)^2) == sum(x^2) - n*mean^2 == ss - s*mean
    # Clamp >= 0 to guard catastrophic cancellation (large-mean/low-variance rows).
    var = jnp.maximum(ss - s * mean, 0.0) * inv_nm1
    std = jnp.sqrt(var)
    # Per-row exact reciprocal: operates on (tile_rows, 1) only, off the
    # per-element critical path; approx=False keeps the 1e-5 accuracy margin.
    inv = pl.reciprocal(std + eps, approx=False)
    alpha = alpha_ref[...].astype(jnp.float32)
    bias = bias_ref[...].astype(jnp.float32)
    o_ref[...] = ((x - mean) * inv * alpha + bias).astype(o_ref.dtype)


def _round_down_mult(x, m):
    return (x // m) * m


def _vmem_capacity_bytes():
    """Best-effort physical VMEM query; conservative (v7x-class) fallback."""
    try:
        info = pltpu.get_tpu_info()
        cap = int(getattr(info, "vmem_capacity_bytes", 0) or 0)
        if cap > 0:
            return cap
    except Exception:
        pass
    return 64 * _MiB  # conservative: treat unknown hardware like v7x


def _choose_tiling(rows, features, itemsize):
    """Returns (tile_rows | None, vmem_limit_bytes).

    Working set per tile row ~= features * (4*itemsize  [2x double-buffered in
    + 2x double-buffered out, model dtype]  +  3*4  [tile-sized f32 temps]).
    tile_rows is None when even the minimum 8-row tile overflows the budget.
    """
    vmem_cap = _vmem_capacity_bytes()
    if vmem_cap >= 96 * _MiB:
        # v5e / v6e class: 128 MiB physical VMEM, 1 TensorCore per chip.
        ws_budget = 88 * _MiB
        vmem_limit = 100 * _MiB
        min_steps = 2  # just enough grid steps for DMA/compute overlap
    else:
        # v7x class (64 MiB physical, 2 TensorCores) or unknown.
        ws_budget = 40 * _MiB
        vmem_limit = 48 * _MiB
        min_steps = 4  # let the "parallel" grid axis shard across both TCs

    per_row_ws = features * (4 * itemsize + 3 * 4)
    if 8 * per_row_ws > ws_budget:
        return None, vmem_limit  # full-feature-resident path won't fit

    t = max(8, _round_down_mult(ws_budget // per_row_ws, 8))
    if t >= rows:
        # Single block covering all rows (block extent == full array dim is
        # legal even when rows is not a multiple of 8).
        return rows, vmem_limit
    cap = _round_down_mult(rows // min_steps, 8)
    if cap >= 8:
        t = min(t, cap)
    return max(t, 8), vmem_limit


def layer_normalization(x, alpha, bias, eps=1e-6, tile_rows=None):
    """x: (..., features); alpha, bias: (features,)."""
    features = x.shape[-1]
    if features < 2:
        raise ValueError("features must be >= 2 (unbiased std divides by features-1)")
    lead_shape = x.shape[:-1]
    rows = 1
    for d in lead_shape:
        rows *= d

    auto_rows, vmem_limit = _choose_tiling(
        rows, features, jnp.dtype(x.dtype).itemsize
    )
    if tile_rows is None:
        tile_rows = auto_rows
    if tile_rows is None:
        # Even the minimum 8-row tile overflows the VMEM budget at this
        # feature dim.
        # TODO(synk): add a feature-split (chunked two-pass) Pallas kernel for
        # very large feature dims; plain-JAX fallback keeps correctness meanwhile.
        x32 = x.astype(jnp.float32)
        mean = jnp.mean(x32, axis=-1, keepdims=True)
        std = jnp.std(x32, axis=-1, keepdims=True, ddof=1)
        return (alpha * (x32 - mean) / (std + eps) + bias).astype(x.dtype)

    # HBM traffic stays in the model dtype; the kernel upcasts to f32 internally.
    x2 = x.reshape(rows, features)
    alpha2 = alpha.reshape(1, features)
    bias2 = bias.reshape(1, features)

    grid = (pl.cdiv(rows, tile_rows),)  # partial last block handled by Pallas
    kernel = functools.partial(
        _layernorm_kernel,
        eps=float(eps),
        inv_n=1.0 / features,
        inv_nm1=1.0 / (features - 1),
    )

    # TODO(synk): for features % 128 != 0 (esp. features < 128) add a
    # lane-packed variant (several rows per 128-lane vreg with segmented row
    # reductions); with a narrow last dim the output store is a masked vst and
    # most lanes sit idle.
    out = pl.pallas_call(
        kernel,
        out_shape=jax.ShapeDtypeStruct((rows, features), x.dtype),
        grid_spec=pltpu.PrefetchScalarGridSpec(
            num_scalar_prefetch=0,
            grid=grid,
            in_specs=[
                pl.BlockSpec((tile_rows, features), lambda i: (i, 0)),
                pl.BlockSpec((1, features), lambda i: (0, 0)),
                pl.BlockSpec((1, features), lambda i: (0, 0)),
            ],
            out_specs=pl.BlockSpec((tile_rows, features), lambda i: (i, 0)),
        ),
        compiler_params=pltpu.CompilerParams(
            dimension_semantics=("parallel",),
            vmem_limit_bytes=vmem_limit,
        ),
    )(x2, alpha2, bias2)

    return out.reshape(*lead_shape, features)


def _reference(x, alpha, bias, eps=1e-6):
    x32 = x.astype(jnp.float32)
    mean = jnp.mean(x32, axis=-1, keepdims=True)
    std = jnp.std(x32, axis=-1, keepdims=True, ddof=1)  # unbiased, like torch
    return (alpha * (x32 - mean) / (std + eps) + bias).astype(x.dtype)


if __name__ == "__main__":
    batch, seq, hidden = 2, 8, 32

    key = jax.random.PRNGKey(0)
    x = jax.random.normal(key, (batch, seq, hidden), dtype=jnp.float32)

    # Deterministic parameter init, matching nn.Parameter(torch.ones/zeros(features))
    alpha = jnp.ones((hidden,), dtype=jnp.float32)
    bias = jnp.zeros((hidden,), dtype=jnp.float32)

    out = layer_normalization(x, alpha, bias, eps=1e-6)
    out = jax.block_until_ready(out)

    ref = _reference(x, alpha, bias, eps=1e-6)
    assert out.shape == x.shape
    assert jnp.allclose(out, ref, atol=1e-5, rtol=1e-5), "mismatch vs reference"

    print("KERNEL_OK")
</pallas_src>

<mosaic_0001>
module attributes {stable_mosaic.version = 11 : i64} {
  func.func @_layernorm_kernel(%arg0: i32, %arg1: memref<16x32xf32, #tpu.memory_space<vmem>>, %arg2: memref<1x32xf32, #tpu.memory_space<vmem>>, %arg3: memref<1x32xf32, #tpu.memory_space<vmem>>, %arg4: memref<16x32xf32, #tpu.memory_space<vmem>>) attributes {dimension_semantics = [#tpu.dimension_semantics<parallel>], iteration_bounds = array<i64: 1>, scalar_prefetch = 0 : i64, scratch_operands = 0 : i64, tpu.core_type = #tpu.core_type<tc>, window_params = [{transform_indices = @transform_0, window_bounds = array<i64: 16, 32>}, {pipeline_mode = #tpu.pipeline_mode<synchronous>, transform_indices = @transform_1, window_bounds = array<i64: 1, 32>}, {pipeline_mode = #tpu.pipeline_mode<synchronous>, transform_indices = @transform_2, window_bounds = array<i64: 1, 32>}, {transform_indices = @transform_3, window_bounds = array<i64: 16, 32>}]} {
    %c0 = arith.constant 0 : index
    %c0_0 = arith.constant 0 : index
    %0 = vector.load %arg1[%c0, %c0_0] : memref<16x32xf32, #tpu.memory_space<vmem>>, vector<16x32xf32>
    %cst = arith.constant dense<0.000000e+00> : vector<16xf32>
    %1 = vector.multi_reduction <add>, %0, %cst [1] : vector<16x32xf32> to vector<16xf32>
    %2 = vector.shape_cast %1 : vector<16xf32> to vector<16x1xf32>
    %3 = arith.mulf %0, %0 : vector<16x32xf32>
    %cst_1 = arith.constant dense<0.000000e+00> : vector<16xf32>
    %4 = vector.multi_reduction <add>, %3, %cst_1 [1] : vector<16x32xf32> to vector<16xf32>
    %5 = vector.shape_cast %4 : vector<16xf32> to vector<16x1xf32>
    %cst_2 = arith.constant 3.125000e-02 : f32
    %6 = vector.broadcast %cst_2 : f32 to vector<16x1xf32>
    %7 = arith.mulf %2, %6 : vector<16x1xf32>
    %8 = arith.mulf %2, %7 : vector<16x1xf32>
    %9 = arith.subf %5, %8 : vector<16x1xf32>
    %cst_3 = arith.constant 0.000000e+00 : f32
    %10 = vector.broadcast %cst_3 : f32 to vector<16x1xf32>
    %11 = arith.maximumf %9, %10 : vector<16x1xf32>
    %cst_4 = arith.constant 0.0322580636 : f32
    %12 = vector.broadcast %cst_4 : f32 to vector<16x1xf32>
    %13 = arith.mulf %11, %12 : vector<16x1xf32>
    %14 = math.sqrt %13 : vector<16x1xf32>
    %cst_5 = arith.constant 9.99999997E-7 : f32
    %15 = vector.broadcast %cst_5 : f32 to vector<16x1xf32>
    %16 = arith.addf %14, %15 : vector<16x1xf32>
    %17 = tpu.reciprocal %16 : vector<16x1xf32> -> vector<16x1xf32>
    %c0_6 = arith.constant 0 : index
    %c0_7 = arith.constant 0 : index
    %18 = vector.load %arg2[%c0_6, %c0_7] : memref<1x32xf32, #tpu.memory_space<vmem>>, vector<1x32xf32>
    %c0_8 = arith.constant 0 : index
    %c0_9 = arith.constant 0 : index
    %19 = vector.load %arg3[%c0_8, %c0_9] : memref<1x32xf32, #tpu.memory_space<vmem>>, vector<1x32xf32>
    %20 = vector.broadcast %7 : vector<16x1xf32> to vector<16x32xf32>
    %21 = arith.subf %0, %20 : vector<16x32xf32>
    %22 = vector.broadcast %17 : vector<16x1xf32> to vector<16x32xf32>
    %23 = arith.mulf %21, %22 : vector<16x32xf32>
    %24 = vector.broadcast %18 : vector<1x32xf32> to vector<16x32xf32>
    %25 = arith.mulf %23, %24 : vector<16x32xf32>
    %26 = vector.broadcast %19 : vector<1x32xf32> to vector<16x32xf32>
    %27 = arith.addf %25, %26 : vector<16x32xf32>
    %c0_10 = arith.constant 0 : index
    %c0_11 = arith.constant 0 : index
    %28 = vector.load %arg4[%c0_10, %c0_11] : memref<16x32xf32, #tpu.memory_space<vmem>>, vector<16x32xf32>
    tpu.vector_store %arg4[%c0_10, %c0_11], %27 {strides = array<i32>} : memref<16x32xf32, #tpu.memory_space<vmem>>, vector<16x32xf32>,
    return
  }
  func.func @transform_0(%arg0: i32) -> (i32, i32) {
    %c0_i32 = arith.constant 0 : i32
    %c0_i32_0 = arith.constant 0 : i32
    return %arg0, %c0_i32 : i32, i32
  }
  func.func @transform_1(%arg0: i32) -> (i32, i32) {
    %c0_i32 = arith.constant 0 : i32
    %c0_i32_0 = arith.constant 0 : i32
    %c0_i32_1 = arith.constant 0 : i32
    return %c0_i32, %c0_i32_0 : i32, i32
  }
  func.func @transform_2(%arg0: i32) -> (i32, i32) {
    %c0_i32 = arith.constant 0 : i32
    %c0_i32_0 = arith.constant 0 : i32
    %c0_i32_1 = arith.constant 0 : i32
    return %c0_i32, %c0_i32_0 : i32, i32
  }
  func.func @transform_3(%arg0: i32) -> (i32, i32) {
    %c0_i32 = arith.constant 0 : i32
    %c0_i32_0 = arith.constant 0 : i32
    return %arg0, %c0_i32 : i32, i32
  }
}

</mosaic_0001>

<llo_original>
// kernel: tpu_custom_call.1
$region0: #{tpu_custom_call.1}
  #allocation0 [shape = 'u32[]', space=smem, size = 0x4, offset = 0x4, fixed_abs, tag = 'smem constant byte address 0x4 - core index']
  #allocation1 [shape = 'u32[144,128]{1,0:T(1,128)}', space=vmem, size = 0x12000, scoped, tag = 'internal scratch']
  %s0 = inlined_call_operand.hbm [shape: f32[16,32], index: 0, kind: input, shape index: {}]
  %s1 = inlined_call_operand.vmem [shape: f32[1,32], index: 1, kind: input, shape index: {}]
  %s2 = inlined_call_operand.vmem [shape: f32[1,32], index: 2, kind: input, shape index: {}]
  %s3 = inlined_call_operand.hbm [shape: f32[16,32], index: 3, kind: output, shape index: {}]
  %s4 = sld [smem:[#allocation0]]
  $region26: #{tpu_custom_call.1} parent=0
    _
  %s6 = ssub.s32 1, %s4
  %s7 = scalar_select 0, %s6, %s4
  $region1: #{tpu_custom_call.1} parent=0
    #allocation2 [shape = 'u8[8192]{0}', space=vmem, size = 0x2000, scoped, tag = 'input window, operand 0, single buffered']
    #allocation3 [shape = 's32[1]{0}', space=sflag, size = 0x4, scoped, tag = 'scoped memory for tpu_custom_call.1']
    #allocation4 [shape = 's32[1]{0}', space=sflag, size = 0x4, scoped, tag = 'scoped memory for tpu_custom_call.1']
    #allocation5 [shape = 'u8[8192]{0}', space=vmem, size = 0x2000, scoped, tag = 'output window, operand 0, single buffered']
    %8 = vsyncpa [#allocation3], 0
    %9 = vsyncpa [#allocation4], 0
    // Predicated region
    $region2: #{tpu_custom_call.1} parent=1 // pred_check
      _
    $region3: #{tpu_custom_call.1} parent=1 // pred_check_branch
      %11 = sbr.rel (0) target = $region5
    $region4: #{tpu_custom_call.1} parent=1 // pred_region
      %s13 = ssub.s32 256, 256
      %14 = vsyncadd [#allocation3], %s13
      %s15 = sshll.u32 [#allocation2], 4
      %s16 = int_to_ptr.vmem [resolvable:$true] %s15
      %21 = dma.hbm_to_vmem [thread:$0]  %s0, 256, %s16, [#allocation3], 128, 128, 8
    $region5: #{tpu_custom_call.1} parent=1 // pred_fallthru
      _
    // Predicated region
    $region6: #{tpu_custom_call.1} parent=1 // pred_check
      _
    $region7: #{tpu_custom_call.1} parent=1 // pred_check_branch
      %23 = sbr.rel (0) target = $region9
    $region8: #{tpu_custom_call.1} parent=1 // pred_region
      _
    $region9: #{tpu_custom_call.1} parent=1 // pred_fallthru
      _
    // Predicated region
    $region10: #{tpu_custom_call.1} parent=1 // pred_check
      _
    $region11: #{tpu_custom_call.1} parent=1 // pred_check_branch
      %25 = sbr.rel (0) target = $region13
    $region12: #{tpu_custom_call.1} parent=1 // pred_region
      _
    $region13: #{tpu_custom_call.1} parent=1 // pred_fallthru
      _
    // Predicated region
    $region14: #{tpu_custom_call.1} parent=1 // pred_check
      _
    $region15: #{tpu_custom_call.1} parent=1 // pred_check_branch
      %27 = sbr.rel (0) target = $region17
    $region16: #{tpu_custom_call.1} parent=1 // pred_region
      %28 = dma.done [#allocation3], 256
    $region17: #{tpu_custom_call.1} parent=1 // pred_fallthru
      _
    %v29 = vld [vmem:[#allocation2] sm:$0xff]
    %v30 = vld [vmem:[#allocation2 + $0x8] sm:$0xff]
    %vm31 = vcmask 261120
    %v32 = vsel %vm31, %v29, 0.0
    %33 = vadd.xlane.f32.xlu0 %v32
    %v34 = vpop.xlane.xlu0 %33
    %v35 = vsel %vm31, %v30, 0.0
    %36 = vadd.xlane.f32.xlu0 %v35
    %v37 = vpop.xlane.xlu0 %36
    %v38 = vmul.f32 %v29, %v29
    %v39 = vmul.f32 %v30, %v30
    %v40 = vsel %vm31, %v38, 0.0
    %41 = vadd.xlane.f32.xlu0 %v40
    %v42 = vpop.xlane.xlu0 %41
    %v43 = vsel %vm31, %v39, 0.0
    %44 = vadd.xlane.f32.xlu0 %v43
    %v45 = vpop.xlane.xlu0 %44
    %v46 = vmul.f32 %v34, 0.03125
    %v47 = vmul.f32 %v37, 0.03125
    %v48 = vmul.f32 %v34, %v46
    %v49 = vmul.f32 %v37, %v47
    %v50 = vsub.f32 %v42, %v48
    %v51 = vsub.f32 %v45, %v49
    %v52 = vmax.f32 %v50, 0.0
    %v53 = vmax.f32 %v51, 0.0
    %v54 = vmul.f32 %v52, 0.032258064
    %v55 = vmul.f32 %v53, 0.032258064
    %v56 = vrsqrt.pop %v54
    %v57 = vmul.f32 %v54, %v56
    %vm58 = vcmp.eq.f32.partialorder %v54, inf
    %v59 = vsel %vm58, %v54, %v57
    %vm60 = vcmp.eq.f32.partialorder %v54, 0.0
    %v61 = vand.u32 %v54, 2147483648
    %v62 = vsel %vm60, %v61, %v59
    %v63 = vrsqrt.pop %v55
    %v64 = vmul.f32 %v55, %v63
    %vm65 = vcmp.eq.f32.partialorder %v55, inf
    %v66 = vsel %vm65, %v55, %v64
    %vm67 = vcmp.eq.f32.partialorder %v55, 0.0
    %v68 = vand.u32 %v55, 2147483648
    %v69 = vsel %vm67, %v68, %v66
    %v70 = vadd.f32 %v62, 1e-06
    %v71 = vadd.f32 %v69, 1e-06
    %v72 = vrcp.pop %v70
    %v73 = vrcp.pop %v71
    %v74 = vld [vmem:[%s1] sm:$0x1]
    %v75 = vld [vmem:[%s2] sm:$0x1]
    %v76 = vsub.f32 %v29, %v46
    %v77 = vsub.f32 %v30, %v47
    %v78 = vmul.f32 %v76, %v72
    %v79 = vmul.f32 %v77, %v73
    %v81 = vlaneseq
    %v82 = vshrl.u32 %v81, 7
    %v83 = vsub.s32 0, %v82
    %v84 = vrot.slane %v74, %v83
    %v86 = vmul.f32 %v78, %v84
    %v87 = vmul.f32 %v79, %v84
    %v89 = vlaneseq
    %v90 = vshrl.u32 %v89, 7
    %v91 = vsub.s32 0, %v90
    %v92 = vrot.slane %v75, %v91
    %v94 = vadd.f32 %v86, %v92
    %v95 = vadd.f32 %v87, %v92
    %96 = vst.msk [vmem:[#allocation5] sm:$0xff] %vm31, %v94
    %97 = vst.msk [vmem:[#allocation5 + $0x8] sm:$0xff] %vm31, %v95
    // Predicated region
    $region18: #{tpu_custom_call.1} parent=1 // pred_check
      _
    $region19: #{tpu_custom_call.1} parent=1 // pred_check_branch
      %99 = sbr.rel (0) target = $region21
    $region20: #{tpu_custom_call.1} parent=1 // pred_region
      %s101 = ssub.s32 256, 256
      %102 = vsyncadd [#allocation4], %s101
      %s103 = sshll.u32 [#allocation5], 4
      %s104 = int_to_ptr.vmem [resolvable:$true] %s103
      %109 = dma.vmem_to_hbm [thread:$0]  %s104, 256, %s3, [#allocation4], 128, 128, 8
    $region21: #{tpu_custom_call.1} parent=1 // pred_fallthru
      _
    // Predicated region
    $region22: #{tpu_custom_call.1} parent=1 // pred_check
      _
    $region23: #{tpu_custom_call.1} parent=1 // pred_check_branch
      %111 = sbr.rel (0) target = $region25
    $region24: #{tpu_custom_call.1} parent=1 // pred_region
      %112 = dma.done [#allocation4], 256
    $region25: #{tpu_custom_call.1} parent=1 // pred_fallthru
      _
    %113 = vsyncpa [#allocation3], 1
    %114 = vsyncpa [#allocation4], 1

</llo_original>
